<compile_context>
chip_gen: v7x
topology: tpu7x:2x2x1
jax: 0.10.0
libtpu: 0.0.40
codegen_flags: <defaults>
</compile_context>

<pallas_src>
import functools

import jax
import jax.numpy as jnp
from jax.experimental import pallas as pl
from jax.experimental.pallas import tpu as pltpu


# Conservative across v5e / v6e / v7x:
#   working set <= 24 MiB, scoped VMEM limit 32 MiB (raises v5e's 16 MiB default,
#   matches the v6e/v7x default, and leaves headroom under v7x's 64 MiB physical).
_VMEM_WORKSET_BUDGET = 24 << 20
_VMEM_LIMIT_BYTES = 32 << 20
_MAX_TILE = 8192  # ~1 MiB blocks at C=32 f32 already reach ~85% of HBM roofline


def _round_up(n, m):
    return ((n + m - 1) // m) * m


# --------------------------- fused single-pass ------------------------------ #

def _fused_kernel(x_ref, w1t_ref, w2_ref, o_ref, *, hw):
    # x_ref: (C, HW) one image; w1t_ref: (C, Cr) = w1.T; w2_ref: (C, Cr); o_ref: (C, HW)
    x = x_ref[...].astype(jnp.float32)
    m = jnp.sum(x, axis=-1, keepdims=True) * (1.0 / hw)                 # (C, 1) true mean
    w1t = w1t_ref[...].astype(jnp.float32)
    w2 = w2_ref[...].astype(jnp.float32)
    # h[j] = relu(sum_c w1[j,c] * m[c])  -> sublane reduce of (C,Cr)*(C,1)
    h = jnp.maximum(jnp.sum(w1t * m, axis=0, keepdims=True), 0.0)       # (1, Cr)
    # y[c] = sigmoid(sum_j w2[c,j] * h[j]) -> lane reduce of (C,Cr)*(1,Cr)
    y = jax.nn.sigmoid(jnp.sum(w2 * h, axis=1, keepdims=True))          # (C, 1)
    # Multiply in f32 (matches reference), cast only at the store.
    o_ref[...] = (x * y).astype(o_ref.dtype)


def _sgca_fused(x_flat, w1, w2):
    B, C, HW = x_flat.shape
    Cr = w1.shape[0]
    itemsize = jnp.dtype(x_flat.dtype).itemsize
    kern = functools.partial(_fused_kernel, hw=HW)
    return pl.pallas_call(
        kern,
        out_shape=jax.ShapeDtypeStruct((B, C, HW), x_flat.dtype),
        grid_spec=pltpu.PrefetchScalarGridSpec(
            num_scalar_prefetch=0,
            grid=(B,),
            in_specs=[
                pl.BlockSpec((pl.Squeezed(), C, HW), lambda b: (b, 0, 0)),
                pl.BlockSpec((C, Cr), lambda b: (0, 0)),
                pl.BlockSpec((C, Cr), lambda b: (0, 0)),
            ],
            out_specs=pl.BlockSpec((pl.Squeezed(), C, HW), lambda b: (b, 0, 0)),
        ),
        compiler_params=pltpu.CompilerParams(
            dimension_semantics=("parallel",),
            vmem_limit_bytes=_VMEM_LIMIT_BYTES),
        cost_estimate=pl.CostEstimate(
            flops=2 * B * C * HW + 4 * B * C * Cr,
            transcendentals=B * C,
            bytes_accessed=2 * B * C * HW * itemsize),
    )(x_flat, jnp.transpose(w1), w2)


# ----------------------------- two-pass fallback ---------------------------- #

def _pool_sum_kernel(x_ref, sum_ref, *, hw, tile):
    # x_ref: (C, TILE) spatial tile of one image; sum_ref: (C, 1) resident accumulator.
    t = pl.program_id(1)

    @pl.when(t == 0)
    def _():
        sum_ref[...] = jnp.zeros_like(sum_ref)

    x = x_ref[...].astype(jnp.float32)
    if hw % tile != 0:
        # Mask the ragged final spatial tile: OOB block reads are unspecified and
        # would otherwise corrupt the channel sums. One VPU select, free under DMA.
        lane = jax.lax.broadcasted_iota(jnp.int32, x.shape, 1)
        x = jnp.where(lane + t * tile < hw, x, 0.0)
    sum_ref[...] += jnp.sum(x, axis=-1, keepdims=True)


def _scale_kernel(x_ref, y_ref, o_ref):
    # x_ref: (C, TILE), y_ref: (C, 1) gate (f32), o_ref: (C, TILE).
    # Multiply in f32, cast only at the store; edge-block OOB stores are dropped.
    x = x_ref[...].astype(jnp.float32)
    o_ref[...] = (x * y_ref[...]).astype(o_ref.dtype)


def _pick_tile(C, HW, itemsize):
    """Largest 128-multiple spatial tile whose pass-2 double-buffered working set
    (2 in + 2 out blocks = 4*C*T*itemsize) fits the VMEM budget, capped at _MAX_TILE."""
    t_budget = max(128, _VMEM_WORKSET_BUDGET // (4 * C * itemsize))
    t = min(t_budget, _MAX_TILE, _round_up(HW, 128))
    return max(128, (t // 128) * 128)


def _sgca_two_pass(x_flat, w1, w2):
    B, C, HW = x_flat.shape
    itemsize = jnp.dtype(x_flat.dtype).itemsize
    tile = _pick_tile(C, HW, itemsize)
    n_t = (HW + tile - 1) // tile

    # ---- Pass 1: global spatial sum, f32 accumulation (no jnp.pad of x) ----
    pool_kern = functools.partial(_pool_sum_kernel, hw=HW, tile=tile)
    sums = pl.pallas_call(
        pool_kern,
        out_shape=jax.ShapeDtypeStruct((B, C, 1), jnp.float32),
        grid_spec=pltpu.PrefetchScalarGridSpec(
            num_scalar_prefetch=0,
            grid=(B, n_t),
            in_specs=[pl.BlockSpec((pl.Squeezed(), C, tile), lambda b, t: (b, 0, t))],
            out_specs=pl.BlockSpec((pl.Squeezed(), C, 1), lambda b, t: (b, 0, 0)),
        ),
        compiler_params=pltpu.CompilerParams(
            dimension_semantics=("parallel", "arbitrary"),
            vmem_limit_bytes=_VMEM_LIMIT_BYTES),
        cost_estimate=pl.CostEstimate(
            flops=B * C * HW,
            transcendentals=0,
            bytes_accessed=B * C * HW * itemsize + B * C * 4),
    )(x_flat)

    # ---- Tiny squeeze-excite MLP + sigmoid in plain XLA (off the hot path) ----
    m = sums[..., 0] * (1.0 / HW)                               # (B, C) true mean
    h = jnp.maximum(m @ w1.T.astype(jnp.float32), 0.0)          # (B, Cr) ReLU
    y = jax.nn.sigmoid(h @ w2.T.astype(jnp.float32))[:, :, None]  # (B, C, 1)

    # ---- Pass 2: lane-dense broadcast scale; writes the true (B, C, HW) extent ----
    out = pl.pallas_call(
        _scale_kernel,
        out_shape=jax.ShapeDtypeStruct((B, C, HW), x_flat.dtype),
        grid_spec=pltpu.PrefetchScalarGridSpec(
            num_scalar_prefetch=0,
            grid=(B, n_t),
            in_specs=[
                pl.BlockSpec((pl.Squeezed(), C, tile), lambda b, t: (b, 0, t)),
                pl.BlockSpec((pl.Squeezed(), C, 1), lambda b, t: (b, 0, 0)),
            ],
            out_specs=pl.BlockSpec((pl.Squeezed(), C, tile), lambda b, t: (b, 0, t)),
        ),
        compiler_params=pltpu.CompilerParams(
            dimension_semantics=("parallel", "parallel"),
            vmem_limit_bytes=_VMEM_LIMIT_BYTES),
        cost_estimate=pl.CostEstimate(
            flops=B * C * HW,
            transcendentals=0,
            bytes_accessed=2 * B * C * HW * itemsize),
    )(x_flat, y)
    return out


# --------------------------------- wrapper ---------------------------------- #

def sgca_pallas(x_nchw, w1, w2, *, force_two_pass=False):
    """x_nchw: (B, C, H, W); w1: (Cr, C); w2: (C, Cr). Returns (B, C, H, W)."""
    B, C, H, W = x_nchw.shape
    HW = H * W
    itemsize = jnp.dtype(x_nchw.dtype).itemsize
    x_flat = x_nchw.reshape(B, C, HW)

    # Fused single pass (1 HBM read + 1 write) when the whole (C, HW) slab,
    # double-buffered in & out plus f32 temporaries, fits the VMEM budget.
    slab = C * _round_up(HW, 128) * itemsize
    slab_f32 = C * _round_up(HW, 128) * 4
    fused_ok = (4 * slab + 2 * slab_f32) <= _VMEM_WORKSET_BUDGET

    if fused_ok and not force_two_pass:
        out = _sgca_fused(x_flat, w1, w2)
    else:
        out = _sgca_two_pass(x_flat, w1, w2)
    return out.reshape(B, C, H, W)


# -------------------------------- reference --------------------------------- #

def sgca_reference(x_nchw, w1, w2):
    """Pure-JAX reference matching the PyTorch forward."""
    m = jnp.mean(x_nchw, axis=(2, 3))                          # (B, C)
    h = jnp.maximum(m @ w1.T, 0.0)                             # (B, Cr)
    y = jax.nn.sigmoid(h @ w2.T)                               # (B, C)
    return x_nchw * y[:, :, None, None]


if __name__ == "__main__":
    key = jax.random.PRNGKey(0)
    k_x, k_w1, k_w2, k_x2 = jax.random.split(key, 4)

    B, C, H, W = 2, 32, 16, 16
    reduction = 8
    Cr = C // reduction

    x = jax.random.normal(k_x, (B, C, H, W), dtype=jnp.float32)
    # Deterministic 1x1-conv weights (no bias), kaiming-uniform-ish scale.
    w1 = jax.random.uniform(k_w1, (Cr, C), jnp.float32, -1.0, 1.0) * (1.0 / jnp.sqrt(C))
    w2 = jax.random.uniform(k_w2, (C, Cr), jnp.float32, -1.0, 1.0) * (1.0 / jnp.sqrt(Cr))

    fn_fused = jax.jit(sgca_pallas)                                        # fused path
    fn_two = jax.jit(functools.partial(sgca_pallas, force_two_pass=True))  # fallback path

    ref = sgca_reference(x, w1, w2)
    out_f = jax.block_until_ready(fn_fused(x, w1, w2))
    out_t = jax.block_until_ready(fn_two(x, w1, w2))
    assert out_f.shape == (B, C, H, W)
    assert jnp.allclose(out_f, ref, atol=1e-5, rtol=1e-5), "fused mismatch vs reference"
    assert jnp.allclose(out_t, ref, atol=1e-5, rtol=1e-5), "two-pass mismatch vs reference"

    # Ragged spatial extent: exercises the fused full-extent block on a non-128
    # multiple HW and the masked edge tile / dropped edge stores of the fallback.
    x2 = jax.random.normal(k_x2, (B, C, 10, 13), dtype=jnp.float32)
    ref2 = sgca_reference(x2, w1, w2)
    out2_f = jax.block_until_ready(fn_fused(x2, w1, w2))
    out2_t = jax.block_until_ready(fn_two(x2, w1, w2))
    assert jnp.allclose(out2_f, ref2, atol=1e-5, rtol=1e-5), "fused ragged mismatch"
    assert jnp.allclose(out2_t, ref2, atol=1e-5, rtol=1e-5), "two-pass ragged mismatch"

    print("KERNEL_OK")
</pallas_src>

<mosaic_0001>
module attributes {stable_mosaic.version = 11 : i64} {
  func.func @_fused_kernel(%arg0: i32, %arg1: memref<1x32x256xf32, #tpu.memory_space<vmem>>, %arg2: memref<32x4xf32, #tpu.memory_space<vmem>>, %arg3: memref<32x4xf32, #tpu.memory_space<vmem>>, %arg4: memref<1x32x256xf32, #tpu.memory_space<vmem>>) attributes {dimension_semantics = [#tpu.dimension_semantics<parallel>], iteration_bounds = array<i64: 2>, scalar_prefetch = 0 : i64, scratch_operands = 0 : i64, tpu.core_type = #tpu.core_type<tc>, window_params = [{transform_indices = @transform_0, window_bounds = array<i64: 1, 32, 256>}, {pipeline_mode = #tpu.pipeline_mode<synchronous>, transform_indices = @transform_1, window_bounds = array<i64: 32, 4>}, {pipeline_mode = #tpu.pipeline_mode<synchronous>, transform_indices = @transform_2, window_bounds = array<i64: 32, 4>}, {transform_indices = @transform_3, window_bounds = array<i64: 1, 32, 256>}]} {
    %c0 = arith.constant 0 : index
    %c0_0 = arith.constant 0 : index
    %c0_1 = arith.constant 0 : index
    %0 = vector.load %arg1[%c0, %c0_0, %c0_1] : memref<1x32x256xf32, #tpu.memory_space<vmem>>, vector<1x32x256xf32>
    %1 = vector.shape_cast %0 : vector<1x32x256xf32> to vector<32x256xf32>
    %cst = arith.constant dense<0.000000e+00> : vector<32xf32>
    %2 = vector.multi_reduction <add>, %1, %cst [1] : vector<32x256xf32> to vector<32xf32>
    %3 = vector.shape_cast %2 : vector<32xf32> to vector<32x1xf32>
    %cst_2 = arith.constant 3.906250e-03 : f32
    %4 = vector.broadcast %cst_2 : f32 to vector<32x1xf32>
    %5 = arith.mulf %3, %4 : vector<32x1xf32>
    %c0_3 = arith.constant 0 : index
    %c0_4 = arith.constant 0 : index
    %6 = vector.load %arg2[%c0_3, %c0_4] : memref<32x4xf32, #tpu.memory_space<vmem>>, vector<32x4xf32>
    %c0_5 = arith.constant 0 : index
    %c0_6 = arith.constant 0 : index
    %7 = vector.load %arg3[%c0_5, %c0_6] : memref<32x4xf32, #tpu.memory_space<vmem>>, vector<32x4xf32>
    %8 = vector.broadcast %5 : vector<32x1xf32> to vector<32x4xf32>
    %9 = arith.mulf %6, %8 : vector<32x4xf32>
    %cst_7 = arith.constant dense<0.000000e+00> : vector<4xf32>
    %10 = vector.multi_reduction <add>, %9, %cst_7 [0] : vector<32x4xf32> to vector<4xf32>
    %11 = vector.shape_cast %10 : vector<4xf32> to vector<1x4xf32>
    %cst_8 = arith.constant 0.000000e+00 : f32
    %12 = vector.broadcast %cst_8 : f32 to vector<1x4xf32>
    %13 = arith.maximumf %11, %12 : vector<1x4xf32>
    %14 = vector.broadcast %13 : vector<1x4xf32> to vector<32x4xf32>
    %15 = arith.mulf %7, %14 : vector<32x4xf32>
    %cst_9 = arith.constant dense<0.000000e+00> : vector<32xf32>
    %16 = vector.multi_reduction <add>, %15, %cst_9 [1] : vector<32x4xf32> to vector<32xf32>
    %17 = vector.shape_cast %16 : vector<32xf32> to vector<32x1xf32>
    %18 = arith.negf %17 : vector<32x1xf32>
    %19 = math.exp %18 : vector<32x1xf32>
    %cst_10 = arith.constant 1.000000e+00 : f32
    %20 = vector.broadcast %cst_10 : f32 to vector<32x1xf32>
    %21 = arith.addf %20, %19 : vector<32x1xf32>
    %22 = arith.divf %20, %21 : vector<32x1xf32>
    %23 = vector.broadcast %22 : vector<32x1xf32> to vector<32x256xf32>
    %24 = arith.mulf %1, %23 : vector<32x256xf32>
    %c0_11 = arith.constant 0 : index
    %c0_12 = arith.constant 0 : index
    %c0_13 = arith.constant 0 : index
    %25 = vector.load %arg4[%c0_11, %c0_12, %c0_13] : memref<1x32x256xf32, #tpu.memory_space<vmem>>, vector<1x32x256xf32>
    %26 = vector.shape_cast %25 : vector<1x32x256xf32> to vector<32x256xf32>
    %27 = vector.shape_cast %24 : vector<32x256xf32> to vector<1x32x256xf32>
    tpu.vector_store %arg4[%c0_11, %c0_12, %c0_13], %27 {strides = array<i32>} : memref<1x32x256xf32, #tpu.memory_space<vmem>>, vector<1x32x256xf32>,
    return
  }
  func.func @transform_0(%arg0: i32) -> (i32, i32, i32) {
    %c0_i32 = arith.constant 0 : i32
    %c0_i32_0 = arith.constant 0 : i32
    %c0_i32_1 = arith.constant 0 : i32
    return %arg0, %c0_i32, %c0_i32_0 : i32, i32, i32
  }
  func.func @transform_1(%arg0: i32) -> (i32, i32) {
    %c0_i32 = arith.constant 0 : i32
    %c0_i32_0 = arith.constant 0 : i32
    %c0_i32_1 = arith.constant 0 : i32
    return %c0_i32, %c0_i32_0 : i32, i32
  }
  func.func @transform_2(%arg0: i32) -> (i32, i32) {
    %c0_i32 = arith.constant 0 : i32
    %c0_i32_0 = arith.constant 0 : i32
    %c0_i32_1 = arith.constant 0 : i32
    return %c0_i32, %c0_i32_0 : i32, i32
  }
  func.func @transform_3(%arg0: i32) -> (i32, i32, i32) {
    %c0_i32 = arith.constant 0 : i32
    %c0_i32_0 = arith.constant 0 : i32
    %c0_i32_1 = arith.constant 0 : i32
    return %arg0, %c0_i32, %c0_i32_0 : i32, i32, i32
  }
}

</mosaic_0001>

<llo_original>
// kernel: sgca_pallas.1
$region0: #{sgca_pallas.1}
  #allocation0 [shape = 'u32[]', space=smem, size = 0x4, offset = 0x4, fixed_abs, tag = 'smem constant byte address 0x4 - core index']
  #allocation1 [shape = 'u32[144,128]{1,0:T(1,128)}', space=vmem, size = 0x12000, scoped, tag = 'internal scratch']
  %s0 = inlined_call_operand.vmem [shape: f32[2,32,256], index: 0, kind: input, shape index: {}]
  %s1 = inlined_call_operand.vmem [shape: f32[32,4], index: 1, kind: input, shape index: {}]
  %s2 = inlined_call_operand.vmem [shape: f32[32,4], index: 2, kind: input, shape index: {}]
  %s3 = inlined_call_operand.vmem [shape: f32[2,32,256], index: 3, kind: output, shape index: {}]
  %s4 = sld [smem:[#allocation0]]
  $region45: #{sgca_pallas.1} parent=0
    _
  %s6 = ssub.s32 1, %s4
  %s7 = scalar_select 0, %s6, %s4
  loop: start=0, step=1, limit=4
  $region2: #{sgca_pallas.1} parent=0 // loop_pre_header
    _
  $region3: #{sgca_pallas.1} parent=0 // loop_header
    %s9 = sphi 0, %s13
    %p10 = scmp.ge.s32.totalorder %s9, 4
    %s19 = sphi 0, %s21
    %s22 = sphi 0, %s19
    %s23 = sphi 0, %s22
    %s39 = sphi 0, %s23
    %s43 = sphi 0, %s43
    %s45 = sphi 0, %s43
    %s46 = sphi 0, %s45
    %s60 = sphi 0, %s46
    %s64 = sphi 0, %s64
    %s66 = sphi 0, %s64
    %s67 = sphi 0, %s66
    %s81 = sphi 0, %s67
    %s87 = sphi 0, %s89
    %s90 = sphi 0, %s87
    %s91 = sphi 0, %s90
    %s107 = sphi 0, %s91
  $region4: #{sgca_pallas.1} parent=0 // loop_header_branch
    %12 = sbr.rel (%p10) target = $region8
  $region5: #{sgca_pallas.1} parent=0 // loop_body
    %s14 = ssub.s32 %s9, 1
    %s15 = ssub.s32 %s9, 2
    %s16 = sadd.s32 %s9, 1
    %s17 = ssub.s32 %s9, %s16
    %p18 = scmp.eq.s32.totalorder %s17, 0
    %s20 = sadd.s32 %s19, 1
    %s21 = scalar_select %p18, %s19, %s20
    %p24 = pneg %p18
    %p25 = scmp.eq.s32.totalorder %s9, 1
    %p26 = por %p24, %p25
    %p27 = scmp.ne.s32.totalorder %s19, %s22
    %p28 = scmp.eq.s32.totalorder %s9, 0
    %p29 = por %p27, %p28
    %p30 = scmp.ne.s32.totalorder %s19, %s22
    %p31 = scmp.eq.s32.totalorder %s14, 1
    %p32 = por %p30, %p31
    %p33 = scmp.ne.s32.totalorder %s22, %s23
    %p34 = scmp.eq.s32.totalorder %s14, 0
    %p35 = por %p33, %p34
    %p36 = scmp.ne.s32.totalorder %s22, %s23
    %p37 = scmp.eq.s32.totalorder %s15, 1
    %p38 = por %p36, %p37
    %p40 = scmp.ne.s32.totalorder %s23, %s39
    %p41 = scmp.eq.s32.totalorder %s15, 0
    %p42 = por %p40, %p41
    %s44 = sadd.s32 %s43, 1
    %p47 = scmp.eq.s32.totalorder %s9, 1
    %p48 = scmp.ne.s32.totalorder %s43, %s45
    %p49 = scmp.eq.s32.totalorder %s9, 0
    %p50 = por %p48, %p49
    %p51 = scmp.ne.s32.totalorder %s43, %s45
    %p52 = scmp.eq.s32.totalorder %s14, 1
    %p53 = por %p51, %p52
    %p54 = scmp.ne.s32.totalorder %s45, %s46
    %p55 = scmp.eq.s32.totalorder %s14, 0
    %p56 = por %p54, %p55
    %p57 = scmp.ne.s32.totalorder %s45, %s46
    %p58 = scmp.eq.s32.totalorder %s15, 1
    %p59 = por %p57, %p58
    %p61 = scmp.ne.s32.totalorder %s46, %s60
    %p62 = scmp.eq.s32.totalorder %s15, 0
    %p63 = por %p61, %p62
    %s65 = sadd.s32 %s64, 1
    %p68 = scmp.eq.s32.totalorder %s9, 1
    %p69 = scmp.ne.s32.totalorder %s64, %s66
    %p70 = scmp.eq.s32.totalorder %s9, 0
    %p71 = por %p69, %p70
    %p72 = scmp.ne.s32.totalorder %s64, %s66
    %p73 = scmp.eq.s32.totalorder %s14, 1
    %p74 = por %p72, %p73
    %p75 = scmp.ne.s32.totalorder %s66, %s67
    %p76 = scmp.eq.s32.totalorder %s14, 0
    %p77 = por %p75, %p76
    %p78 = scmp.ne.s32.totalorder %s66, %s67
    %p79 = scmp.eq.s32.totalorder %s15, 1
    %p80 = por %p78, %p79
    %p82 = scmp.ne.s32.totalorder %s67, %s81
    %p83 = scmp.eq.s32.totalorder %s15, 0
    %p84 = por %p82, %p83
    %s85 = ssub.s32 %s9, %s16
    %p86 = scmp.eq.s32.totalorder %s85, 0
    %s88 = sadd.s32 %s87, 1
    %s89 = scalar_select %p86, %s87, %s88
    %p92 = pneg %p86
    %p93 = scmp.eq.s32.totalorder %s9, 1
    %p94 = por %p92, %p93
    %p95 = scmp.ne.s32.totalorder %s87, %s90
    %p96 = scmp.eq.s32.totalorder %s9, 0
    %p97 = por %p95, %p96
    %p98 = scmp.ne.s32.totalorder %s87, %s90
    %p99 = scmp.eq.s32.totalorder %s14, 1
    %p100 = por %p98, %p99
    %p101 = scmp.ne.s32.totalorder %s90, %s91
    %p102 = scmp.eq.s32.totalorder %s14, 0
    %p103 = por %p101, %p102
    %p104 = scmp.ne.s32.totalorder %s90, %s91
    %p105 = scmp.eq.s32.totalorder %s15, 1
    %p106 = por %p104, %p105
    %p108 = scmp.ne.s32.totalorder %s91, %s107
    %p109 = scmp.eq.s32.totalorder %s15, 0
    %p110 = por %p108, %p109
    %p111 = scmp.le.s32.totalorder 1, %s9
    %p112 = scmp.lt.s32.totalorder %s9, 3
    %p113 = pnand %p111, %p112
    %p114 = pneg %p113
    // Predicated region
    $region9: #{sgca_pallas.1} parent=5 // pred_check
      _
    $region10: #{sgca_pallas.1} parent=5 // pred_check_branch
      %116 = sbr.rel (%p113) target = $region12
    $region11: #{sgca_pallas.1} parent=5 // pred_region
      %s117 = ssub.s32 %s9, 1
      // Predicated region
      $region13: #{sgca_pallas.1} parent=11 // pred_check
        %p118 = pneg %p56
      $region14: #{sgca_pallas.1} parent=11 // pred_check_branch
        %120 = sbr.rel (%p118) target = $region16
      $region15: #{sgca_pallas.1} parent=11 // pred_region
        _
      $region16: #{sgca_pallas.1} parent=11 // pred_fallthru
        _
      // Predicated region
      $region17: #{sgca_pallas.1} parent=11 // pred_check
        %p121 = pneg %p77
      $region18: #{sgca_pallas.1} parent=11 // pred_check_branch
        %123 = sbr.rel (%p121) target = $region20
      $region19: #{sgca_pallas.1} parent=11 // pred_region
        _
      $region20: #{sgca_pallas.1} parent=11 // pred_fallthru
        _
    $region12: #{sgca_pallas.1} parent=5 // pred_fallthru
      _
    %p124 = scmp.lt.s32.totalorder %s9, 2
    // Predicated region
    $region21: #{sgca_pallas.1} parent=5 // pred_check
      %p125 = pneg %p124
    $region22: #{sgca_pallas.1} parent=5 // pred_check_branch
      %127 = sbr.rel (%p125) target = $region24
    $region23: #{sgca_pallas.1} parent=5 // pred_region
      // Predicated region
      $region25: #{sgca_pallas.1} parent=23 // pred_check
        %p128 = pneg %p29
      $region26: #{sgca_pallas.1} parent=23 // pred_check_branch
        %130 = sbr.rel (%p128) target = $region28
      $region27: #{sgca_pallas.1} parent=23 // pred_region
        %p131 = scmp.lt.s32.totalorder %s9, 1
        %s132 = scalar_select %p131, %s9, 1
        %s133 = smul.addr %s132, 8
        %s134 = smul.addr %s133, 8
        %s135 = scalar_lea.vmem %s0, %s134
      $region28: #{sgca_pallas.1} parent=23 // pred_fallthru
        _
    $region24: #{sgca_pallas.1} parent=5 // pred_fallthru
      _
    %p136 = scmp.le.s32.totalorder 1, %s9
    %p137 = scmp.lt.s32.totalorder %s9, 3
    %p138 = pnand %p136, %p137
    %p139 = pneg %p138
    // Predicated region
    $region29: #{sgca_pallas.1} parent=5 // pred_check
      _
    $region30: #{sgca_pallas.1} parent=5 // pred_check_branch
      %141 = sbr.rel (%p138) target = $region32
    $region31: #{sgca_pallas.1} parent=5 // pred_region
      %s142 = ssub.s32 %s9, 1
      %p143 = scmp.lt.s32.totalorder %s14, 1
      %s144 = scalar_select %p143, %s14, 1
      %s145 = smul.addr %s144, 8
      %s146 = smul.addr %s145, 8
      %s147 = scalar_lea.vmem %s0, %s146
      %p148 = pneg %p35
      %p149 = pneg %p32
      %p150 = pneg %p56
      %p151 = pneg %p53
      %p152 = pneg %p77
      %p153 = pneg %p74
      %p154 = pneg %p103
      %p155 = pneg %p100
      %p156 = scmp.lt.s32.totalorder %s14, 1
      %s157 = scalar_select %p156, %s14, 1
      %s158 = smul.addr %s157, 8
      %s159 = smul.addr %s158, 8
      %s160 = scalar_lea.vmem %s3, %s159
      %p161 = scmp.lt.s32.totalorder %s14, 1
      %s162 = scalar_select %p161, %s14, 1
      %s163 = smul.addr %s162, 8
      %s164 = smul.addr %s163, 8
      %s165 = scalar_lea.vmem %s0, %s164
      %p166 = scmp.lt.s32.totalorder %s14, 1
      %s167 = scalar_select %p166, %s14, 1
      %s168 = smul.addr %s167, 8
      %s169 = smul.addr %s168, 8
      %s170 = scalar_lea.vmem %s3, %s169
      %v171 = vld [vmem:[%s165] sm:$0xff]
      %v172 = vld [vmem:[%s165 + $0x8] sm:$0xff]
      %v173 = vld [vmem:[%s165 + $0x10] sm:$0xff]
      %v174 = vld [vmem:[%s165 + $0x18] sm:$0xff]
      %v175 = vld [vmem:[%s165 + $0x20] sm:$0xff]
      %v176 = vld [vmem:[%s165 + $0x28] sm:$0xff]
      %v177 = vld [vmem:[%s165 + $0x30] sm:$0xff]
      %v178 = vld [vmem:[%s165 + $0x38] sm:$0xff]
      %v179 = vadd.f32 %v171, %v172
      %180 = vadd.xlane.f32.xlu0 %v179
      %v181 = vpop.xlane.xlu0 %180
      %v182 = vadd.f32 %v173, %v174
      %183 = vadd.xlane.f32.xlu0 %v182
      %v184 = vpop.xlane.xlu0 %183
      %v185 = vadd.f32 %v175, %v176
      %186 = vadd.xlane.f32.xlu0 %v185
      %v187 = vpop.xlane.xlu0 %186
      %v188 = vadd.f32 %v177, %v178
      %189 = vadd.xlane.f32.xlu0 %v188
      %v190 = vpop.xlane.xlu0 %189
      %v191 = vmul.f32 %v181, 0.00390625
      %v192 = vmul.f32 %v184, 0.00390625
      %v193 = vmul.f32 %v187, 0.00390625
      %v194 = vmul.f32 %v190, 0.00390625
      %v195 = vld [vmem:[%s1] sm:$0xff]
      %v196 = vld [vmem:[%s1 + $0x8] sm:$0xff]
      %v197 = vld [vmem:[%s1 + $0x10] sm:$0xff]
      %v198 = vld [vmem:[%s1 + $0x18] sm:$0xff]
      %v199 = vld [vmem:[%s2] sm:$0xff]
      %v200 = vld [vmem:[%s2 + $0x8] sm:$0xff]
      %v201 = vld [vmem:[%s2 + $0x10] sm:$0xff]
      %v202 = vld [vmem:[%s2 + $0x18] sm:$0xff]
      %v203 = vmul.f32 %v195, %v191
      %v204 = vmul.f32 %v196, %v192
      %v205 = vmul.f32 %v197, %v193
      %v206 = vmul.f32 %v198, %v194
      %vm207 = vcmask 31744
      %v208 = vsel %vm207, %v203, 0.0
      %v209 = vsel %vm207, %v204, 0.0
      %v210 = vadd.f32 %v208, %v209
      %v211 = vsel %vm207, %v205, 0.0
      %v212 = vadd.f32 %v210, %v211
      %v213 = vsel %vm207, %v206, 0.0
      %v214 = vadd.f32 %v212, %v213
      %v215 = vrot.slane %v214, 4
      %v216 = vadd.f32 %v214, %v215
      %v217 = vrot.slane %v216, 2
      %v218 = vadd.f32 %v216, %v217
      %v219 = vrot.slane %v218, 1
      %v220 = vadd.f32 %v218, %v219
      %v221 = vmax.f32 %v220, 0.0
      %v222 = vmul.f32 %v199, %v221
      %v223 = vmul.f32 %v200, %v221
      %v224 = vmul.f32 %v201, %v221
      %v225 = vmul.f32 %v202, %v221
      %v226 = vsel %vm207, %v222, 0.0
      %227 = vadd.xlane.f32.xlu0 %v226
      %v228 = vpop.xlane.xlu0 %227
      %v229 = vsel %vm207, %v223, 0.0
      %230 = vadd.xlane.f32.xlu0 %v229
      %v231 = vpop.xlane.xlu0 %230
      %v232 = vsel %vm207, %v224, 0.0
      %233 = vadd.xlane.f32.xlu0 %v232
      %v234 = vpop.xlane.xlu0 %233
      %v235 = vsel %vm207, %v225, 0.0
      %236 = vadd.xlane.f32.xlu0 %v235
      %v237 = vpop.xlane.xlu0 %236
      %v238 = vxor.u32 %v228, 2147483648
      %v239 = vxor.u32 %v231, 2147483648
      %v240 = vxor.u32 %v234, 2147483648
      %v241 = vxor.u32 %v237, 2147483648
      %v242 = vmul.f32 %v238, 1.442695
      %v243 = vpow.pop %v242
      %v244 = vmul.f32 %v239, 1.442695
      %v245 = vpow.pop %v244
      %v246 = vmul.f32 %v240, 1.442695
      %v247 = vpow.pop %v246
      %v248 = vmul.f32 %v241, 1.442695
      %v249 = vpow.pop %v248
      %v250 = vadd.f32 %v243, 1.0
      %v251 = vadd.f32 %v245, 1.0
      %v252 = vadd.f32 %v247, 1.0
      %v253 = vadd.f32 %v249, 1.0
      %v254 = vrcp.pop %v250
      %v255 = vmul.f32 1.0, %v254
      %v256 = vrcp.pop %v251
      %v257 = vmul.f32 1.0, %v256
      %v258 = vrcp.pop %v252
      %v259 = vmul.f32 1.0, %v258
      %v260 = vrcp.pop %v253
      %v261 = vmul.f32 1.0, %v260
      %v262 = vmul.f32 %v171, %v255
      %v263 = vmul.f32 %v172, %v255
      %v264 = vmul.f32 %v173, %v257
      %v265 = vmul.f32 %v174, %v257
      %v266 = vmul.f32 %v175, %v259
      %v267 = vmul.f32 %v176, %v259
      %v268 = vmul.f32 %v177, %v261
      %v269 = vmul.f32 %v178, %v261
      %270 = vst [vmem:[%s170] sm:$0xff] %v262
      %271 = vst [vmem:[%s170 + $0x8] sm:$0xff] %v263
      %272 = vst [vmem:[%s170 + $0x10] sm:$0xff] %v264
      %273 = vst [vmem:[%s170 + $0x18] sm:$0xff] %v265
      %274 = vst [vmem:[%s170 + $0x20] sm:$0xff] %v266
      %275 = vst [vmem:[%s170 + $0x28] sm:$0xff] %v267
      %276 = vst [vmem:[%s170 + $0x30] sm:$0xff] %v268
      %277 = vst [vmem:[%s170 + $0x38] sm:$0xff] %v269
      %p278 = scmp.lt.s32.totalorder %s14, 1
      %s279 = scalar_select %p278, %s14, 1
      %s280 = smul.addr %s279, 8
      %s281 = smul.addr %s280, 8
      %s282 = scalar_lea.vmem %s3, %s281
      // Predicated region
      $region33: #{sgca_pallas.1} parent=31 // pred_check
        %p283 = pneg %p100
      $region34: #{sgca_pallas.1} parent=31 // pred_check_branch
        %285 = sbr.rel (%p283) target = $region36
      $region35: #{sgca_pallas.1} parent=31 // pred_region
        _
      $region36: #{sgca_pallas.1} parent=31 // pred_fallthru
        _
    $region32: #{sgca_pallas.1} parent=5 // pred_fallthru
      _
    %p286 = scmp.le.s32.totalorder 2, %s9
    // Predicated region
    $region37: #{sgca_pallas.1} parent=5 // pred_check
      %p287 = pneg %p286
    $region38: #{sgca_pallas.1} parent=5 // pred_check_branch
      %289 = sbr.rel (%p287) target = $region40
    $region39: #{sgca_pallas.1} parent=5 // pred_region
      %s290 = ssub.s32 %s9, 2
      // Predicated region
      $region41: #{sgca_pallas.1} parent=39 // pred_check
        %p291 = pneg %p106
      $region42: #{sgca_pallas.1} parent=39 // pred_check_branch
        %293 = sbr.rel (%p291) target = $region44
      $region43: #{sgca_pallas.1} parent=39 // pred_region
        %p294 = scmp.lt.s32.totalorder %s15, 1
        %s295 = scalar_select %p294, %s15, 1
        %s296 = smul.addr %s295, 8
        %s297 = smul.addr %s296, 8
        %s298 = scalar_lea.vmem %s3, %s297
      $region44: #{sgca_pallas.1} parent=39 // pred_fallthru
        _
    $region40: #{sgca_pallas.1} parent=5 // pred_fallthru
      _
  $region6: #{sgca_pallas.1} parent=0 // loop_footer
    %s13 = sadd.s32 1, %s9
  $region7: #{sgca_pallas.1} parent=0 // loop_footer_branch
    %8 = sbr.rel target = $region3
  $region8: #{sgca_pallas.1} parent=0 // loop_exit
    _

</llo_original>
